<compile_context>
chip_gen: v6e
topology: v6e:2x2x1
jax: 0.10.0
libtpu: 0.0.40
codegen_flags: <defaults>
</compile_context>

<pallas_src>
import jax
import jax.numpy as jnp
from jax.experimental import pallas as pl
from jax.experimental.pallas import tpu as pltpu

_LANE = 128
_MAX_BLOCK_B = 2048


def policy_kernel(x_ref, w1_ref, b1_ref, w2_ref, b2_ref, w3_ref, b3_ref, out_ref):
    # x arrives f32; cast to bf16 in-kernel (VPU, hidden under MXU work).
    # All dots accumulate in f32; bias add / relu / tanh stay in f32.
    x = x_ref[...].astype(jnp.bfloat16)
    h1 = jnp.dot(x, w1_ref[...], preferred_element_type=jnp.float32) + b1_ref[...]
    h1 = jnp.maximum(h1, 0.0).astype(jnp.bfloat16)
    h2 = jnp.dot(h1, w2_ref[...], preferred_element_type=jnp.float32) + b2_ref[...]
    h2 = jnp.maximum(h2, 0.0).astype(jnp.bfloat16)
    h3 = jnp.dot(h2, w3_ref[...], preferred_element_type=jnp.float32) + b3_ref[...]
    # bf16 lane-dense output slab: tanh output is in [-1, 1], bf16 is ample.
    out_ref[...] = jnp.tanh(h3).astype(jnp.bfloat16)


def prepare_params(params):
    """One-time param prep (hoisted out of the per-call path): bf16 weight
    casts, lane-padding of the last layer to a dense 128-wide slab."""
    action_dim = params["W3"].shape[1]
    a_pad = max(_LANE, ((action_dim + _LANE - 1) // _LANE) * _LANE)
    w3 = jnp.pad(params["W3"], ((0, 0), (0, a_pad - action_dim)))
    b3 = jnp.pad(params["b3"], ((0, 0), (0, a_pad - action_dim)))
    return {
        "W1": params["W1"].astype(jnp.bfloat16),
        "b1": params["b1"].astype(jnp.float32),
        "W2": params["W2"].astype(jnp.bfloat16),
        "b2": params["b2"].astype(jnp.float32),
        "W3": w3.astype(jnp.bfloat16),
        "b3": b3.astype(jnp.float32),
        "action_dim": action_dim,
        "a_pad": a_pad,
    }


def _select_block_b(B):
    if B <= 256:
        return max(B, 1)                      # single step; overhead negligible
    if B <= 2 * _MAX_BLOCK_B:
        # Two ~even "parallel" steps so both v7x TensorCores get work.
        half = pl.cdiv(B, 2)
        return min(((half + 15) // 16) * 16, B)
    return _MAX_BLOCK_B


def policy_forward(x, prepped, *, block_b=None):
    """x: (B, state_dim) float32.  prepped: output of prepare_params()."""
    B, state_dim = x.shape
    hidden = prepped["W1"].shape[1]
    a_pad = prepped["a_pad"]
    action_dim = prepped["action_dim"]

    if block_b is None:
        block_b = _select_block_b(B)
    block_b = max(1, min(block_b, B))
    grid = (pl.cdiv(B, block_b),)             # ragged last block is edge-masked

    flops = 2 * B * (state_dim * hidden + hidden * hidden + hidden * a_pad)
    bytes_accessed = (
        B * state_dim * 4                                              # x (f32)
        + (state_dim * hidden + hidden * hidden + hidden * a_pad) * 2  # W (bf16)
        + (2 * hidden + a_pad) * 4                                     # biases
        + B * a_pad * 2                                                # out (bf16)
    )
    cost = pl.CostEstimate(
        flops=flops, transcendentals=B * a_pad, bytes_accessed=bytes_accessed
    )

    out = pl.pallas_call(
        policy_kernel,
        out_shape=jax.ShapeDtypeStruct((B, a_pad), jnp.bfloat16),
        grid_spec=pltpu.PrefetchScalarGridSpec(
            num_scalar_prefetch=0,
            grid=grid,
            in_specs=[
                # batch tile of the input (f32, cast in-kernel)
                pl.BlockSpec((block_b, state_dim), lambda i: (i, 0)),
                # weights / biases: small, fully resident every step
                pl.BlockSpec((state_dim, hidden), lambda i: (0, 0)),
                pl.BlockSpec((1, hidden), lambda i: (0, 0)),
                pl.BlockSpec((hidden, hidden), lambda i: (0, 0)),
                pl.BlockSpec((1, hidden), lambda i: (0, 0)),
                pl.BlockSpec((hidden, a_pad), lambda i: (0, 0)),
                pl.BlockSpec((1, a_pad), lambda i: (0, 0)),
            ],
            out_specs=pl.BlockSpec((block_b, a_pad), lambda i: (i, 0)),
        ),
        compiler_params=pltpu.CompilerParams(
            dimension_semantics=("parallel",),
            vmem_limit_bytes=32 * 1024 * 1024,
        ),
        cost_estimate=cost,
    )(x.astype(jnp.float32), prepped["W1"], prepped["b1"], prepped["W2"],
      prepped["b2"], prepped["W3"], prepped["b3"])

    # Slice off lane padding; return f32 for parity with the PyTorch module.
    return out[:, :action_dim].astype(jnp.float32)


def init_params(key, state_dim, action_dim, hidden=256):
    """Deterministic synthetic init (uniform +/- 1/sqrt(fan_in), like nn.Linear).
    Weights stored as (in, out) = transpose of nn.Linear's weight."""
    ks = jax.random.split(key, 6)

    def lin(kw, kb, fan_in, fan_out):
        bound = 1.0 / jnp.sqrt(fan_in)
        W = jax.random.uniform(kw, (fan_in, fan_out), jnp.float32, -bound, bound)
        b = jax.random.uniform(kb, (1, fan_out), jnp.float32, -bound, bound)
        return W, b

    W1, b1 = lin(ks[0], ks[1], state_dim, hidden)
    W2, b2 = lin(ks[2], ks[3], hidden, hidden)
    W3, b3 = lin(ks[4], ks[5], hidden, action_dim)
    return {"W1": W1, "b1": b1, "W2": W2, "b2": b2, "W3": W3, "b3": b3}


def reference_forward_f32(x, p):
    h1 = jnp.maximum(x @ p["W1"] + p["b1"], 0.0)
    h2 = jnp.maximum(h1 @ p["W2"] + p["b2"], 0.0)
    return jnp.tanh(h2 @ p["W3"] + p["b3"])


def reference_forward_bf16(x, p):
    # Mirrors the kernel numerics: bf16 matmul inputs, f32 accumulation.
    w1 = p["W1"].astype(jnp.bfloat16)
    w2 = p["W2"].astype(jnp.bfloat16)
    w3 = p["W3"].astype(jnp.bfloat16)
    h1 = jnp.dot(x.astype(jnp.bfloat16), w1, preferred_element_type=jnp.float32) + p["b1"]
    h1 = jnp.maximum(h1, 0.0)
    h2 = jnp.dot(h1.astype(jnp.bfloat16), w2, preferred_element_type=jnp.float32) + p["b2"]
    h2 = jnp.maximum(h2, 0.0)
    h3 = jnp.dot(h2.astype(jnp.bfloat16), w3, preferred_element_type=jnp.float32) + p["b3"]
    return jnp.tanh(h3)


if __name__ == "__main__":
    key = jax.random.PRNGKey(0)
    kx, kp, kx2, kx3 = jax.random.split(key, 4)

    batch, state_dim, action_dim = 8, 16, 8
    x = jax.random.normal(kx, (batch, state_dim), jnp.float32)
    params = init_params(kp, state_dim, action_dim, hidden=256)
    prepped = prepare_params(params)          # one-time weight prep (hoisted)

    # Check 1: small batch -> single grid step, whole net VMEM-resident.
    out = jax.block_until_ready(policy_forward(x, prepped))
    assert out.shape == (batch, action_dim)
    ref_bf16 = reference_forward_bf16(x, params)
    ref_f32 = reference_forward_f32(x, params)
    assert jnp.allclose(out, ref_bf16, atol=1e-2, rtol=1e-2), "mismatch vs bf16 reference"
    assert jnp.allclose(out, ref_f32, atol=5e-2, rtol=5e-2), "mismatch vs f32 reference"

    # Check 2: multi-step grid with a ragged (edge-masked) last block.
    batch2 = 40
    x2 = jax.random.normal(kx2, (batch2, state_dim), jnp.float32)
    out2 = jax.block_until_ready(policy_forward(x2, prepped, block_b=16))
    assert out2.shape == (batch2, action_dim)
    ref2 = reference_forward_bf16(x2, params)
    assert jnp.allclose(out2, ref2, atol=1e-2, rtol=1e-2), "mismatch (ragged tiled path)"

    # Check 3: mid-size batch -> automatic two-way even split (v7x path).
    batch3 = 300
    x3 = jax.random.normal(kx3, (batch3, state_dim), jnp.float32)
    out3 = jax.block_until_ready(policy_forward(x3, prepped))
    assert out3.shape == (batch3, action_dim)
    ref3 = reference_forward_bf16(x3, params)
    assert jnp.allclose(out3, ref3, atol=1e-2, rtol=1e-2), "mismatch (auto-split path)"

    print("KERNEL_OK")
</pallas_src>

<mosaic_0001>
module attributes {stable_mosaic.version = 11 : i64} {
  func.func @policy_kernel(%arg0: i32, %arg1: memref<8x16xf32, #tpu.memory_space<vmem>>, %arg2: memref<16x256xbf16, #tpu.memory_space<vmem>>, %arg3: memref<1x256xf32, #tpu.memory_space<vmem>>, %arg4: memref<256x256xbf16, #tpu.memory_space<vmem>>, %arg5: memref<1x256xf32, #tpu.memory_space<vmem>>, %arg6: memref<256x128xbf16, #tpu.memory_space<vmem>>, %arg7: memref<1x128xf32, #tpu.memory_space<vmem>>, %arg8: memref<8x128xbf16, #tpu.memory_space<vmem>>) attributes {dimension_semantics = [#tpu.dimension_semantics<parallel>], iteration_bounds = array<i64: 1>, scalar_prefetch = 0 : i64, scratch_operands = 0 : i64, tpu.core_type = #tpu.core_type<tc>, window_params = [{transform_indices = @transform_0, window_bounds = array<i64: 8, 16>}, {pipeline_mode = #tpu.pipeline_mode<synchronous>, transform_indices = @transform_1, window_bounds = array<i64: 16, 256>}, {pipeline_mode = #tpu.pipeline_mode<synchronous>, transform_indices = @transform_2, window_bounds = array<i64: 1, 256>}, {pipeline_mode = #tpu.pipeline_mode<synchronous>, transform_indices = @transform_3, window_bounds = array<i64: 256, 256>}, {pipeline_mode = #tpu.pipeline_mode<synchronous>, transform_indices = @transform_4, window_bounds = array<i64: 1, 256>}, {pipeline_mode = #tpu.pipeline_mode<synchronous>, transform_indices = @transform_5, window_bounds = array<i64: 256, 128>}, {pipeline_mode = #tpu.pipeline_mode<synchronous>, transform_indices = @transform_6, window_bounds = array<i64: 1, 128>}, {transform_indices = @transform_7, window_bounds = array<i64: 8, 128>}]} {
    %c0 = arith.constant 0 : index
    %c0_0 = arith.constant 0 : index
    %0 = vector.load %arg1[%c0, %c0_0] : memref<8x16xf32, #tpu.memory_space<vmem>>, vector<8x16xf32>
    %1 = arith.truncf %0 : vector<8x16xf32> to vector<8x16xbf16>
    %c0_1 = arith.constant 0 : index
    %c0_2 = arith.constant 0 : index
    %2 = vector.load %arg2[%c0_1, %c0_2] : memref<16x256xbf16, #tpu.memory_space<vmem>>, vector<16x256xbf16>
    %cst = arith.constant dense<0.000000e+00> : vector<8x256xf32>
    %3 = tpu.matmul %1, %2, %cst {dimension_numbers = #tpu.dot_dimension_numbers<[1], [0], [0], [1], [0, 0, 1, 1], [], []>} : vector<8x16xbf16>, vector<16x256xbf16>, vector<8x256xf32> -> vector<8x256xf32>
    %c0_3 = arith.constant 0 : index
    %c0_4 = arith.constant 0 : index
    %4 = vector.load %arg3[%c0_3, %c0_4] : memref<1x256xf32, #tpu.memory_space<vmem>>, vector<1x256xf32>
    %5 = vector.broadcast %4 : vector<1x256xf32> to vector<8x256xf32>
    %6 = arith.addf %3, %5 : vector<8x256xf32>
    %cst_5 = arith.constant 0.000000e+00 : f32
    %7 = vector.broadcast %cst_5 : f32 to vector<8x256xf32>
    %8 = arith.maximumf %6, %7 : vector<8x256xf32>
    %9 = arith.truncf %8 : vector<8x256xf32> to vector<8x256xbf16>
    %c0_6 = arith.constant 0 : index
    %c0_7 = arith.constant 0 : index
    %10 = vector.load %arg4[%c0_6, %c0_7] : memref<256x256xbf16, #tpu.memory_space<vmem>>, vector<256x256xbf16>
    %cst_8 = arith.constant dense<0.000000e+00> : vector<8x256xf32>
    %11 = tpu.matmul %9, %10, %cst_8 {dimension_numbers = #tpu.dot_dimension_numbers<[1], [0], [0], [1], [0, 0, 1, 1], [], []>} : vector<8x256xbf16>, vector<256x256xbf16>, vector<8x256xf32> -> vector<8x256xf32>
    %c0_9 = arith.constant 0 : index
    %c0_10 = arith.constant 0 : index
    %12 = vector.load %arg5[%c0_9, %c0_10] : memref<1x256xf32, #tpu.memory_space<vmem>>, vector<1x256xf32>
    %13 = vector.broadcast %12 : vector<1x256xf32> to vector<8x256xf32>
    %14 = arith.addf %11, %13 : vector<8x256xf32>
    %cst_11 = arith.constant 0.000000e+00 : f32
    %15 = vector.broadcast %cst_11 : f32 to vector<8x256xf32>
    %16 = arith.maximumf %14, %15 : vector<8x256xf32>
    %17 = arith.truncf %16 : vector<8x256xf32> to vector<8x256xbf16>
    %c0_12 = arith.constant 0 : index
    %c0_13 = arith.constant 0 : index
    %18 = vector.load %arg6[%c0_12, %c0_13] : memref<256x128xbf16, #tpu.memory_space<vmem>>, vector<256x128xbf16>
    %cst_14 = arith.constant dense<0.000000e+00> : vector<8x128xf32>
    %19 = tpu.matmul %17, %18, %cst_14 {dimension_numbers = #tpu.dot_dimension_numbers<[1], [0], [0], [1], [0, 0, 1, 1], [], []>} : vector<8x256xbf16>, vector<256x128xbf16>, vector<8x128xf32> -> vector<8x128xf32>
    %c0_15 = arith.constant 0 : index
    %c0_16 = arith.constant 0 : index
    %20 = vector.load %arg7[%c0_15, %c0_16] : memref<1x128xf32, #tpu.memory_space<vmem>>, vector<1x128xf32>
    %21 = vector.broadcast %20 : vector<1x128xf32> to vector<8x128xf32>
    %22 = arith.addf %19, %21 : vector<8x128xf32>
    %23 = math.tanh %22 : vector<8x128xf32>
    %24 = arith.truncf %23 : vector<8x128xf32> to vector<8x128xbf16>
    %c0_17 = arith.constant 0 : index
    %c0_18 = arith.constant 0 : index
    %25 = vector.load %arg8[%c0_17, %c0_18] : memref<8x128xbf16, #tpu.memory_space<vmem>>, vector<8x128xbf16>
    tpu.vector_store %arg8[%c0_17, %c0_18], %24 {strides = array<i32>} : memref<8x128xbf16, #tpu.memory_space<vmem>>, vector<8x128xbf16>,
    return
  }
  func.func @transform_0(%arg0: i32) -> (i32, i32) {
    %c0_i32 = arith.constant 0 : i32
    %c0_i32_0 = arith.constant 0 : i32
    return %arg0, %c0_i32 : i32, i32
  }
  func.func @transform_1(%arg0: i32) -> (i32, i32) {
    %c0_i32 = arith.constant 0 : i32
    %c0_i32_0 = arith.constant 0 : i32
    %c0_i32_1 = arith.constant 0 : i32
    return %c0_i32, %c0_i32_0 : i32, i32
  }
  func.func @transform_2(%arg0: i32) -> (i32, i32) {
    %c0_i32 = arith.constant 0 : i32
    %c0_i32_0 = arith.constant 0 : i32
    %c0_i32_1 = arith.constant 0 : i32
    return %c0_i32, %c0_i32_0 : i32, i32
  }
  func.func @transform_3(%arg0: i32) -> (i32, i32) {
    %c0_i32 = arith.constant 0 : i32
    %c0_i32_0 = arith.constant 0 : i32
    %c0_i32_1 = arith.constant 0 : i32
    return %c0_i32, %c0_i32_0 : i32, i32
  }
  func.func @transform_4(%arg0: i32) -> (i32, i32) {
    %c0_i32 = arith.constant 0 : i32
    %c0_i32_0 = arith.constant 0 : i32
    %c0_i32_1 = arith.constant 0 : i32
    return %c0_i32, %c0_i32_0 : i32, i32
  }
  func.func @transform_5(%arg0: i32) -> (i32, i32) {
    %c0_i32 = arith.constant 0 : i32
    %c0_i32_0 = arith.constant 0 : i32
    %c0_i32_1 = arith.constant 0 : i32
    return %c0_i32, %c0_i32_0 : i32, i32
  }
  func.func @transform_6(%arg0: i32) -> (i32, i32) {
    %c0_i32 = arith.constant 0 : i32
    %c0_i32_0 = arith.constant 0 : i32
    %c0_i32_1 = arith.constant 0 : i32
    return %c0_i32, %c0_i32_0 : i32, i32
  }
  func.func @transform_7(%arg0: i32) -> (i32, i32) {
    %c0_i32 = arith.constant 0 : i32
    %c0_i32_0 = arith.constant 0 : i32
    return %arg0, %c0_i32 : i32, i32
  }
}

</mosaic_0001>

<llo_original>
// kernel: tpu_custom_call.1
$region0: #{tpu_custom_call.1}
  #allocation0 [shape = 'u32[]', space=smem, size = 0x4, offset = 0x4, fixed_abs, tag = 'smem constant byte address 0x4 - core index']
  #allocation1 [shape = 'u32[144,128]{1,0:T(1,128)}', space=vmem, size = 0x12000, scoped, tag = 'internal scratch']
  %s0 = inlined_call_operand.hbm [shape: f32[8,16], index: 0, kind: input, shape index: {}]
  %s1 = inlined_call_operand.hbm [shape: bf16[16,256], index: 1, kind: input, shape index: {}]
  %s2 = inlined_call_operand.vmem [shape: f32[1,256], index: 2, kind: input, shape index: {}]
  %s3 = inlined_call_operand.hbm [shape: bf16[256,256], index: 3, kind: input, shape index: {}]
  %s4 = inlined_call_operand.vmem [shape: f32[1,256], index: 4, kind: input, shape index: {}]
  %s5 = inlined_call_operand.hbm [shape: bf16[256,128], index: 5, kind: input, shape index: {}]
  %s6 = inlined_call_operand.vmem [shape: f32[1,128], index: 6, kind: input, shape index: {}]
  %s7 = inlined_call_operand.hbm [shape: bf16[8,128], index: 7, kind: output, shape index: {}]
  %s8 = sld [smem:[#allocation0]]
  $region54: #{tpu_custom_call.1} parent=0
    _
  %s10 = ssub.s32 1, %s8
  %s11 = scalar_select 0, %s10, %s8
  $region1: #{tpu_custom_call.1} parent=0
    #allocation2 [shape = 'u8[4096]{0}', space=vmem, size = 0x1000, scoped, tag = 'input window, operand 0, single buffered']
    #allocation3 [shape = 's32[1]{0}', space=sflag, size = 0x4, scoped, tag = 'scoped memory for tpu_custom_call.1']
    #allocation4 [shape = 's32[1]{0}', space=sflag, size = 0x4, scoped, tag = 'scoped memory for tpu_custom_call.1']
    #allocation5 [shape = 'u8[8192]{0}', space=vmem, size = 0x2000, scoped, tag = 'input window, operand 1, single buffered']
    #allocation6 [shape = 's32[1]{0}', space=sflag, size = 0x4, scoped, tag = 'scoped memory for tpu_custom_call.1']
    #allocation7 [shape = 'u8[131072]{0}', space=vmem, size = 0x20000, scoped, tag = 'input window, operand 3, single buffered']
    #allocation8 [shape = 'u8[65536]{0}', space=vmem, size = 0x10000, scoped, tag = 'input window, operand 5, single buffered']
    #allocation9 [shape = 's32[1]{0}', space=sflag, size = 0x4, scoped, tag = 'scoped memory for tpu_custom_call.1']
    #allocation10 [shape = 'u8[2048]{0}', space=vmem, size = 0x800, scoped, tag = 'output window, operand 0, single buffered']
    %12 = vsyncpa [#allocation3], 0
    %13 = vsyncpa [#allocation6], 0
    %14 = vsyncpa [#allocation9], 0
    %15 = vsyncpa [#allocation4], 0
    // Predicated region
    $region2: #{tpu_custom_call.1} parent=1 // pred_check
      _
    $region3: #{tpu_custom_call.1} parent=1 // pred_check_branch
      %17 = sbr.rel (0) target = $region5
    $region4: #{tpu_custom_call.1} parent=1 // pred_region
      %s19 = ssub.s32 128, 128
      %20 = vsyncadd [#allocation3], %s19
      %s22 = sshll.u32 [#allocation2], 4
      %s23 = int_to_ptr.vmem [resolvable:$true] %s22
      %25 = dma.hbm_to_vmem [thread:$0]  %s0, 128, %s23, [#allocation3]
    $region5: #{tpu_custom_call.1} parent=1 // pred_fallthru
      _
    // Predicated region
    $region6: #{tpu_custom_call.1} parent=1 // pred_check
      _
    $region7: #{tpu_custom_call.1} parent=1 // pred_check_branch
      %27 = sbr.rel (0) target = $region9
    $region8: #{tpu_custom_call.1} parent=1 // pred_region
      %s29 = ssub.s32 256, 256
      %30 = vsyncadd [#allocation6], %s29
      %s31 = sshll.u32 [#allocation5], 4
      %s32 = int_to_ptr.vmem [resolvable:$true] %s31
      %37 = dma.hbm_to_vmem [thread:$0]  %s1, 256, %s32, [#allocation6], 128, 128, 8
    $region9: #{tpu_custom_call.1} parent=1 // pred_fallthru
      _
    // Predicated region
    $region10: #{tpu_custom_call.1} parent=1 // pred_check
      _
    $region11: #{tpu_custom_call.1} parent=1 // pred_check_branch
      %39 = sbr.rel (0) target = $region13
    $region12: #{tpu_custom_call.1} parent=1 // pred_region
      _
    $region13: #{tpu_custom_call.1} parent=1 // pred_fallthru
      _
    // Predicated region
    $region14: #{tpu_custom_call.1} parent=1 // pred_check
      _
    $region15: #{tpu_custom_call.1} parent=1 // pred_check_branch
      %41 = sbr.rel (0) target = $region17
    $region16: #{tpu_custom_call.1} parent=1 // pred_region
      %s43 = ssub.s32 4096, 4096
      %44 = vsyncadd [#allocation6], %s43
      %s45 = sshll.u32 [#allocation7], 4
      %s46 = int_to_ptr.vmem [resolvable:$true] %s45
      %51 = dma.hbm_to_vmem [thread:$0]  %s3, 4096, %s46, [#allocation6], 128, 128, 8
    $region17: #{tpu_custom_call.1} parent=1 // pred_fallthru
      _
    // Predicated region
    $region18: #{tpu_custom_call.1} parent=1 // pred_check
      _
    $region19: #{tpu_custom_call.1} parent=1 // pred_check_branch
      %53 = sbr.rel (0) target = $region21
    $region20: #{tpu_custom_call.1} parent=1 // pred_region
      _
    $region21: #{tpu_custom_call.1} parent=1 // pred_fallthru
      _
    // Predicated region
    $region22: #{tpu_custom_call.1} parent=1 // pred_check
      _
    $region23: #{tpu_custom_call.1} parent=1 // pred_check_branch
      %55 = sbr.rel (0) target = $region25
    $region24: #{tpu_custom_call.1} parent=1 // pred_region
      %s57 = ssub.s32 2048, 2048
      %58 = vsyncadd [#allocation9], %s57
      %s59 = sshll.u32 [#allocation8], 4
      %s60 = int_to_ptr.vmem [resolvable:$true] %s59
      %65 = dma.hbm_to_vmem [thread:$0]  %s5, 2048, %s60, [#allocation9], 64, 64, 4
    $region25: #{tpu_custom_call.1} parent=1 // pred_fallthru
      _
    // Predicated region
    $region26: #{tpu_custom_call.1} parent=1 // pred_check
      _
    $region27: #{tpu_custom_call.1} parent=1 // pred_check_branch
      %67 = sbr.rel (0) target = $region29
    $region28: #{tpu_custom_call.1} parent=1 // pred_region
      _
    $region29: #{tpu_custom_call.1} parent=1 // pred_fallthru
      _
    // Predicated region
    $region30: #{tpu_custom_call.1} parent=1 // pred_check
      _
    $region31: #{tpu_custom_call.1} parent=1 // pred_check_branch
      %69 = sbr.rel (0) target = $region33
    $region32: #{tpu_custom_call.1} parent=1 // pred_region
      %70 = dma.done [#allocation3], 128
    $region33: #{tpu_custom_call.1} parent=1 // pred_fallthru
      _
    // Predicated region
    $region34: #{tpu_custom_call.1} parent=1 // pred_check
      _
    $region35: #{tpu_custom_call.1} parent=1 // pred_check_branch
      %72 = sbr.rel (0) target = $region37
    $region36: #{tpu_custom_call.1} parent=1 // pred_region
      %73 = dma.done [#allocation6], 256
    $region37: #{tpu_custom_call.1} parent=1 // pred_fallthru
      _
    // Predicated region
    $region38: #{tpu_custom_call.1} parent=1 // pred_check
      _
    $region39: #{tpu_custom_call.1} parent=1 // pred_check_branch
      %75 = sbr.rel (0) target = $region41
    $region40: #{tpu_custom_call.1} parent=1 // pred_region
      %76 = dma.done [#allocation6], 4096
    $region41: #{tpu_custom_call.1} parent=1 // pred_fallthru
      _
    // Predicated region
    $region42: #{tpu_custom_call.1} parent=1 // pred_check
      _
    $region43: #{tpu_custom_call.1} parent=1 // pred_check_branch
      %78 = sbr.rel (0) target = $region45
    $region44: #{tpu_custom_call.1} parent=1 // pred_region
      %79 = dma.done [#allocation9], 2048
    $region45: #{tpu_custom_call.1} parent=1 // pred_fallthru
      _
    %v81 = vld [vmem:[#allocation2] sm:$0xff]
    %v82 = vpack.c.bf16 %v81, %v81
    %v83 = vld [vmem:[#allocation5] sm:$0xff]
    %v84 = vld [vmem:[#allocation5 + $0x8] sm:$0xff]
    %v85 = vld [vmem:[%s2] sm:$0x3]
    %v87 = vlaneseq
    %v88 = vshrl.u32 %v87, 7
    %v89 = vsub.s32 0, %v88
    %v90 = vrot.slane %v85, %v89
    %v91 = vlaneseq
    %v92 = vshrl.u32 %v91, 7
    %v93 = vsub.s32 1, %v92
    %v94 = vrot.slane %v85, %v93
    %v99 = vunpack.c.l.b16 %v83
    %v100 = vunpack.c.h.b16 %v83
    %v101 = vunpack.c.l.b16 %v84
    %v102 = vunpack.c.h.b16 %v84
    %v103 = vpack.c.b16 %v101, %v99
    %v104 = vpack.c.b16 %v102, %v100
    %vm107 = vcmask 130048
    %v109 = vsel %vm107, %v82, 0
    %111 = vmatprep.subr.bf16.mxu0 0
    %112 = vmatpush1.bf16.msra.mxu0 0
    %113 = vmatprep.subr.bf16.mxu0 0
    %114 = vmatpush1.bf16.msra.mxu0 0
    %115 = vmatprep.subr.bf16.mxu0 0
    %116 = vmatpush1.bf16.msra.mxu0 0
    %117 = vmatprep.subr.bf16.mxu0 0
    %118 = vmatpush1.bf16.msra.mxu0 0
    %119 = vmatprep.subr.bf16.mxu0 0
    %120 = vmatpush1.bf16.msra.mxu0 0
    %121 = vmatprep.subr.bf16.mxu0 0
    %122 = vmatpush1.bf16.msra.mxu0 0
    %123 = vmatprep.subr.bf16.mxu0 0
    %124 = vmatpush1.bf16.msra.mxu0 0
    %125 = vmatprep.subr.bf16.mxu0 %v104
    %126 = vmatpush1.bf16.msra.mxu0 %v103
    %127 = vmatprep.subr.bf16.mxu0 0
    %128 = vmatpush2.bf16.msra.mxu0 0
    %129 = vmatprep.subr.bf16.mxu0 0
    %130 = vmatpush2.bf16.msra.mxu0 0
    %131 = vmatprep.subr.bf16.mxu0 0
    %132 = vmatpush2.bf16.msra.mxu0 0
    %133 = vmatprep.subr.bf16.mxu0 0
    %134 = vmatpush2.bf16.msra.mxu0 0
    %135 = vmatprep.subr.bf16.mxu0 0
    %136 = vmatpush2.bf16.msra.mxu0 0
    %137 = vmatprep.subr.bf16.mxu0 0
    %138 = vmatpush2.bf16.msra.mxu0 0
    %139 = vmatprep.subr.bf16.mxu0 0
    %140 = vmatpush2.bf16.msra.mxu0 0
    %141 = vmatprep.subr.bf16.mxu0 0
    %142 = vmatpush2.bf16.msra.mxu0 0
    %143 = vmatprep.mubr.bf16.mxu0 0
    %144 = vmatmul.mubr.bf16.gmra.mxu0 %v109
    %v145 = vpop.f32.mrf.mxu0
    %v146 = vadd.f32 %v90, %v145
    %v147 = vpop.f32.mrf.mxu0
    %v148 = vadd.f32 %v94, %v147
    %v149 = vpop.f32.mrf.mxu0
    %v150 = vpop.f32.mrf.mxu0
    %151 = vdwg.mxu0
    %v152 = vmax.f32 %v146, 0.0
    %v153 = vmax.f32 %v148, 0.0
    %v154 = vpack.c.bf16 %v152, %v152
    %v155 = vpack.c.bf16 %v153, %v153
    %v156 = vld [vmem:[#allocation7] sm:$0xff]
    %v157 = vld [vmem:[#allocation7 + $0x8] sm:$0xff]
    %v158 = vld [vmem:[#allocation7 + $0x10] sm:$0xff]
    %v159 = vld [vmem:[#allocation7 + $0x18] sm:$0xff]
    %v160 = vld [vmem:[#allocation7 + $0x20] sm:$0xff]
    %v161 = vld [vmem:[#allocation7 + $0x28] sm:$0xff]
    %v162 = vld [vmem:[#allocation7 + $0x30] sm:$0xff]
    %v163 = vld [vmem:[#allocation7 + $0x38] sm:$0xff]
    %v164 = vld [vmem:[#allocation7 + $0x40] sm:$0xff]
    %v165 = vld [vmem:[#allocation7 + $0x48] sm:$0xff]
    %v166 = vld [vmem:[#allocation7 + $0x50] sm:$0xff]
    %v167 = vld [vmem:[#allocation7 + $0x58] sm:$0xff]
    %v168 = vld [vmem:[#allocation7 + $0x60] sm:$0xff]
    %v169 = vld [vmem:[#allocation7 + $0x68] sm:$0xff]
    %v170 = vld [vmem:[#allocation7 + $0x70] sm:$0xff]
    %v171 = vld [vmem:[#allocation7 + $0x78] sm:$0xff]
    %v172 = vld [vmem:[#allocation7 + $0x80] sm:$0xff]
    %v173 = vld [vmem:[#allocation7 + $0x88] sm:$0xff]
    %v174 = vld [vmem:[#allocation7 + $0x90] sm:$0xff]
    %v175 = vld [vmem:[#allocation7 + $0x98] sm:$0xff]
    %v176 = vld [vmem:[#allocation7 + $0xa0] sm:$0xff]
    %v177 = vld [vmem:[#allocation7 + $0xa8] sm:$0xff]
    %v178 = vld [vmem:[#allocation7 + $0xb0] sm:$0xff]
    %v179 = vld [vmem:[#allocation7 + $0xb8] sm:$0xff]
    %v180 = vld [vmem:[#allocation7 + $0xc0] sm:$0xff]
    %v181 = vld [vmem:[#allocation7 + $0xc8] sm:$0xff]
    %v182 = vld [vmem:[#allocation7 + $0xd0] sm:$0xff]
    %v183 = vld [vmem:[#allocation7 + $0xd8] sm:$0xff]
    %v184 = vld [vmem:[#allocation7 + $0xe0] sm:$0xff]
    %v185 = vld [vmem:[#allocation7 + $0xe8] sm:$0xff]
    %v186 = vld [vmem:[#allocation7 + $0xf0] sm:$0xff]
    %v187 = vld [vmem:[#allocation7 + $0xf8] sm:$0xff]
    %v188 = vld [vmem:[%s4] sm:$0x3]
    %v190 = vlaneseq
    %v191 = vshrl.u32 %v190, 7
    %v192 = vsub.s32 0, %v191
    %v193 = vrot.slane %v188, %v192
    %v194 = vlaneseq
    %v195 = vshrl.u32 %v194, 7
    %v196 = vsub.s32 1, %v195
    %v197 = vrot.slane %v188, %v196
    %v232 = vunpack.c.l.b16 %v156
    %v233 = vunpack.c.h.b16 %v156
    %v234 = vunpack.c.l.b16 %v157
    %v235 = vunpack.c.h.b16 %v157
    %v236 = vunpack.c.l.b16 %v158
    %v237 = vunpack.c.h.b16 %v158
    %v238 = vunpack.c.l.b16 %v159
    %v239 = vunpack.c.h.b16 %v159
    %v240 = vunpack.c.l.b16 %v160
    %v241 = vunpack.c.h.b16 %v160
    %v242 = vunpack.c.l.b16 %v161
    %v243 = vunpack.c.h.b16 %v161
    %v244 = vunpack.c.l.b16 %v162
    %v245 = vunpack.c.h.b16 %v162
    %v246 = vunpack.c.l.b16 %v163
    %v247 = vunpack.c.h.b16 %v163
    %v248 = vunpack.c.l.b16 %v164
    %v249 = vunpack.c.h.b16 %v164
    %v250 = vunpack.c.l.b16 %v165
    %v251 = vunpack.c.h.b16 %v165
    %v252 = vunpack.c.l.b16 %v166
    %v253 = vunpack.c.h.b16 %v166
    %v254 = vunpack.c.l.b16 %v167
    %v255 = vunpack.c.h.b16 %v167
    %v256 = vunpack.c.l.b16 %v168
    %v257 = vunpack.c.h.b16 %v168
    %v258 = vunpack.c.l.b16 %v169
    %v259 = vunpack.c.h.b16 %v169
    %v260 = vunpack.c.l.b16 %v170
    %v261 = vunpack.c.h.b16 %v170
    %v262 = vunpack.c.l.b16 %v171
    %v263 = vunpack.c.h.b16 %v171
    %v264 = vunpack.c.l.b16 %v172
    %v265 = vunpack.c.h.b16 %v172
    %v266 = vunpack.c.l.b16 %v173
    %v267 = vunpack.c.h.b16 %v173
    %v268 = vunpack.c.l.b16 %v174
    %v269 = vunpack.c.h.b16 %v174
    %v270 = vunpack.c.l.b16 %v175
    %v271 = vunpack.c.h.b16 %v175
    %v272 = vunpack.c.l.b16 %v176
    %v273 = vunpack.c.h.b16 %v176
    %v274 = vunpack.c.l.b16 %v177
    %v275 = vunpack.c.h.b16 %v177
    %v276 = vunpack.c.l.b16 %v178
    %v277 = vunpack.c.h.b16 %v178
    %v278 = vunpack.c.l.b16 %v179
    %v279 = vunpack.c.h.b16 %v179
    %v280 = vunpack.c.l.b16 %v180
    %v281 = vunpack.c.h.b16 %v180
    %v282 = vunpack.c.l.b16 %v181
    %v283 = vunpack.c.h.b16 %v181
    %v284 = vunpack.c.l.b16 %v182
    %v285 = vunpack.c.h.b16 %v182
    %v286 = vunpack.c.l.b16 %v183
    %v287 = vunpack.c.h.b16 %v183
    %v288 = vunpack.c.l.b16 %v184
    %v289 = vunpack.c.h.b16 %v184
    %v290 = vunpack.c.l.b16 %v185
    %v291 = vunpack.c.h.b16 %v185
    %v292 = vunpack.c.l.b16 %v186
    %v293 = vunpack.c.h.b16 %v186
    %v294 = vunpack.c.l.b16 %v187
    %v295 = vunpack.c.h.b16 %v187
    %v296 = vpack.c.b16 %v234, %v232
    %v297 = vpack.c.b16 %v235, %v233
    %v298 = vpack.c.b16 %v238, %v236
    %v299 = vpack.c.b16 %v239, %v237
    %v300 = vpack.c.b16 %v242, %v240
    %v301 = vpack.c.b16 %v243, %v241
    %v302 = vpack.c.b16 %v246, %v244
    %v303 = vpack.c.b16 %v247, %v245
    %v304 = vpack.c.b16 %v250, %v248
    %v305 = vpack.c.b16 %v251, %v249
    %v306 = vpack.c.b16 %v254, %v252
    %v307 = vpack.c.b16 %v255, %v253
    %v308 = vpack.c.b16 %v258, %v256
    %v309 = vpack.c.b16 %v259, %v257
    %v310 = vpack.c.b16 %v262, %v260
    %v311 = vpack.c.b16 %v263, %v261
    %v312 = vpack.c.b16 %v266, %v264
    %v313 = vpack.c.b16 %v267, %v265
    %v314 = vpack.c.b16 %v270, %v268
    %v315 = vpack.c.b16 %v271, %v269
    %v316 = vpack.c.b16 %v274, %v272
    %v317 = vpack.c.b16 %v275, %v273
    %v318 = vpack.c.b16 %v278, %v276
    %v319 = vpack.c.b16 %v279, %v277
    %v320 = vpack.c.b16 %v282, %v280
    %v321 = vpack.c.b16 %v283, %v281
    %v322 = vpack.c.b16 %v286, %v284
    %v323 = vpack.c.b16 %v287, %v285
    %v324 = vpack.c.b16 %v290, %v288
    %v325 = vpack.c.b16 %v291, %v289
    %v326 = vpack.c.b16 %v294, %v292
    %v327 = vpack.c.b16 %v295, %v293
    %360 = vmatprep.subr.bf16.mxu0 %v311
    %361 = vmatpush1.bf16.msra.mxu0 %v310
    %362 = vmatprep.subr.bf16.mxu0 %v309
    %363 = vmatpush1.bf16.msra.mxu0 %v308
    %364 = vmatprep.subr.bf16.mxu0 %v307
    %365 = vmatpush1.bf16.msra.mxu0 %v306
    %366 = vmatprep.subr.bf16.mxu0 %v305
    %367 = vmatpush1.bf16.msra.mxu0 %v304
    %368 = vmatprep.subr.bf16.mxu0 %v303
    %369 = vmatpush1.bf16.msra.mxu0 %v302
    %370 = vmatprep.subr.bf16.mxu0 %v301
    %371 = vmatpush1.bf16.msra.mxu0 %v300
    %372 = vmatprep.subr.bf16.mxu0 %v299
    %373 = vmatpush1.bf16.msra.mxu0 %v298
    %374 = vmatprep.subr.bf16.mxu0 %v297
    %375 = vmatpush1.bf16.msra.mxu0 %v296
    %376 = vmatprep.subr.bf16.mxu0 %v327
    %377 = vmatpush2.bf16.msra.mxu0 %v326
    %378 = vmatprep.subr.bf16.mxu0 %v325
    %379 = vmatpush2.bf16.msra.mxu0 %v324
    %380 = vmatprep.subr.bf16.mxu0 %v323
    %381 = vmatpush2.bf16.msra.mxu0 %v322
    %382 = vmatprep.subr.bf16.mxu0 %v321
    %383 = vmatpush2.bf16.msra.mxu0 %v320
    %384 = vmatprep.subr.bf16.mxu0 %v319
    %385 = vmatpush2.bf16.msra.mxu0 %v318
    %386 = vmatprep.subr.bf16.mxu0 %v317
    %387 = vmatpush2.bf16.msra.mxu0 %v316
    %388 = vmatprep.subr.bf16.mxu0 %v315
    %389 = vmatpush2.bf16.msra.mxu0 %v314
    %390 = vmatprep.subr.bf16.mxu0 %v313
    %391 = vmatpush2.bf16.msra.mxu0 %v312
    %392 = vmatprep.mubr.bf16.mxu0 %v155
    %393 = vmatmul.mubr.bf16.gmra.mxu0 %v154
    %v394 = vpop.f32.mrf.mxu0
    %v395 = vadd.f32 %v193, %v394
    %v396 = vpop.f32.mrf.mxu0
    %v397 = vadd.f32 %v197, %v396
    %v398 = vpop.f32.mrf.mxu0
    %v399 = vpop.f32.mrf.mxu0
    %400 = vdwg.mxu0
    %v401 = vmax.f32 %v395, 0.0
    %v402 = vmax.f32 %v397, 0.0
    %v403 = vpack.c.bf16 %v401, %v401
    %v404 = vpack.c.bf16 %v402, %v402
    %v405 = vld [vmem:[#allocation8] sm:$0xf]
    %v406 = vld [vmem:[#allocation8 + $0x4] sm:$0xf]
    %v407 = vld [vmem:[#allocation8 + $0x8] sm:$0xf]
    %v408 = vld [vmem:[#allocation8 + $0xc] sm:$0xf]
    %v409 = vld [vmem:[#allocation8 + $0x10] sm:$0xf]
    %v410 = vld [vmem:[#allocation8 + $0x14] sm:$0xf]
    %v411 = vld [vmem:[#allocation8 + $0x18] sm:$0xf]
    %v412 = vld [vmem:[#allocation8 + $0x1c] sm:$0xf]
    %v413 = vld [vmem:[#allocation8 + $0x20] sm:$0xf]
    %v414 = vld [vmem:[#allocation8 + $0x24] sm:$0xf]
    %v415 = vld [vmem:[#allocation8 + $0x28] sm:$0xf]
    %v416 = vld [vmem:[#allocation8 + $0x2c] sm:$0xf]
    %v417 = vld [vmem:[#allocation8 + $0x30] sm:$0xf]
    %v418 = vld [vmem:[#allocation8 + $0x34] sm:$0xf]
    %v419 = vld [vmem:[#allocation8 + $0x38] sm:$0xf]
    %v420 = vld [vmem:[#allocation8 + $0x3c] sm:$0xf]
    %v421 = vld [vmem:[#allocation8 + $0x40] sm:$0xf]
    %v422 = vld [vmem:[#allocation8 + $0x44] sm:$0xf]
    %v423 = vld [vmem:[#allocation8 + $0x48] sm:$0xf]
    %v424 = vld [vmem:[#allocation8 + $0x4c] sm:$0xf]
    %v425 = vld [vmem:[#allocation8 + $0x50] sm:$0xf]
    %v426 = vld [vmem:[#allocation8 + $0x54] sm:$0xf]
    %v427 = vld [vmem:[#allocation8 + $0x58] sm:$0xf]
    %v428 = vld [vmem:[#allocation8 + $0x5c] sm:$0xf]
    %v429 = vld [vmem:[#allocation8 + $0x60] sm:$0xf]
    %v430 = vld [vmem:[#allocation8 + $0x64] sm:$0xf]
    %v431 = vld [vmem:[#allocation8 + $0x68] sm:$0xf]
    %v432 = vld [vmem:[#allocation8 + $0x6c] sm:$0xf]
    %v433 = vld [vmem:[#allocation8 + $0x70] sm:$0xf]
    %v434 = vld [vmem:[#allocation8 + $0x74] sm:$0xf]
    %v435 = vld [vmem:[#allocation8 + $0x78] sm:$0xf]
    %v436 = vld [vmem:[#allocation8 + $0x7c] sm:$0xf]
    %v437 = vld [vmem:[%s6] sm:$0x1]
    %v439 = vlaneseq
    %v440 = vshrl.u32 %v439, 7
    %v441 = vsub.s32 0, %v440
    %v442 = vrot.slane %v437, %v441
    %v476 = vunpack.c.l.b16 %v405
    %v477 = vunpack.c.l.b16 %v406
    %v478 = vunpack.c.l.b16 %v407
    %v479 = vunpack.c.l.b16 %v408
    %v480 = vunpack.c.l.b16 %v409
    %v481 = vunpack.c.l.b16 %v410
    %v482 = vunpack.c.l.b16 %v411
    %v483 = vunpack.c.l.b16 %v412
    %v484 = vunpack.c.l.b16 %v413
    %v485 = vunpack.c.l.b16 %v414
    %v486 = vunpack.c.l.b16 %v415
    %v487 = vunpack.c.l.b16 %v416
    %v488 = vunpack.c.l.b16 %v417
    %v489 = vunpack.c.l.b16 %v418
    %v490 = vunpack.c.l.b16 %v419
    %v491 = vunpack.c.l.b16 %v420
    %v492 = vunpack.c.l.b16 %v421
    %v493 = vunpack.c.l.b16 %v422
    %v494 = vunpack.c.l.b16 %v423
    %v495 = vunpack.c.l.b16 %v424
    %v496 = vunpack.c.l.b16 %v425
    %v497 = vunpack.c.l.b16 %v426
    %v498 = vunpack.c.l.b16 %v427
    %v499 = vunpack.c.l.b16 %v428
    %v500 = vunpack.c.l.b16 %v429
    %v501 = vunpack.c.l.b16 %v430
    %v502 = vunpack.c.l.b16 %v431
    %v503 = vunpack.c.l.b16 %v432
    %v504 = vunpack.c.l.b16 %v433
    %v505 = vunpack.c.l.b16 %v434
    %v506 = vunpack.c.l.b16 %v435
    %v507 = vunpack.c.l.b16 %v436
    %v508 = vpack.c.b16 %v477, %v476
    %v509 = vpack.c.b16 %v479, %v478
    %v510 = vpack.c.b16 %v481, %v480
    %v511 = vpack.c.b16 %v483, %v482
    %v512 = vpack.c.b16 %v485, %v484
    %v513 = vpack.c.b16 %v487, %v486
    %v514 = vpack.c.b16 %v489, %v488
    %v515 = vpack.c.b16 %v491, %v490
    %v516 = vpack.c.b16 %v493, %v492
    %v517 = vpack.c.b16 %v495, %v494
    %v518 = vpack.c.b16 %v497, %v496
    %v519 = vpack.c.b16 %v499, %v498
    %v520 = vpack.c.b16 %v501, %v500
    %v521 = vpack.c.b16 %v503, %v502
    %v522 = vpack.c.b16 %v505, %v504
    %v523 = vpack.c.b16 %v507, %v506
    %540 = vmatprep.subr.bf16.mxu0 0
    %541 = vmatpush1.bf16.msra.mxu0 %v515
    %542 = vmatprep.subr.bf16.mxu0 0
    %543 = vmatpush1.bf16.msra.mxu0 %v514
    %544 = vmatprep.subr.bf16.mxu0 0
    %545 = vmatpush1.bf16.msra.mxu0 %v513
    %546 = vmatprep.subr.bf16.mxu0 0
    %547 = vmatpush1.bf16.msra.mxu0 %v512
    %548 = vmatprep.subr.bf16.mxu0 0
    %549 = vmatpush1.bf16.msra.mxu0 %v511
    %550 = vmatprep.subr.bf16.mxu0 0
    %551 = vmatpush1.bf16.msra.mxu0 %v510
    %552 = vmatprep.subr.bf16.mxu0 0
    %553 = vmatpush1.bf16.msra.mxu0 %v509
    %554 = vmatprep.subr.bf16.mxu0 0
    %555 = vmatpush1.bf16.msra.mxu0 %v508
    %556 = vmatprep.subr.bf16.mxu0 0
    %557 = vmatpush2.bf16.msra.mxu0 %v523
    %558 = vmatprep.subr.bf16.mxu0 0
    %559 = vmatpush2.bf16.msra.mxu0 %v522
    %560 = vmatprep.subr.bf16.mxu0 0
    %561 = vmatpush2.bf16.msra.mxu0 %v521
    %562 = vmatprep.subr.bf16.mxu0 0
    %563 = vmatpush2.bf16.msra.mxu0 %v520
    %564 = vmatprep.subr.bf16.mxu0 0
    %565 = vmatpush2.bf16.msra.mxu0 %v519
    %566 = vmatprep.subr.bf16.mxu0 0
    %567 = vmatpush2.bf16.msra.mxu0 %v518
    %568 = vmatprep.subr.bf16.mxu0 0
    %569 = vmatpush2.bf16.msra.mxu0 %v517
    %570 = vmatprep.subr.bf16.mxu0 0
    %571 = vmatpush2.bf16.msra.mxu0 %v516
    %572 = vmatprep.mubr.bf16.mxu0 %v404
    %573 = vmatmul.mubr.bf16.gmra.mxu0 %v403
    %v574 = vpop.f32.mrf.mxu0
    %v575 = vadd.f32 %v442, %v574
    %v576 = vpop.f32.mrf.mxu0
    %v577 = vpop.f32.mrf.mxu0
    %v578 = vpop.f32.mrf.mxu0
    %579 = vdwg.mxu0
    %v580 = vtanh.pop %v575
    %v581 = vpack.c.bf16 %v580, %v580
    %582 = vst [vmem:[#allocation10] sm:$0xf] %v581
    // Predicated region
    $region46: #{tpu_custom_call.1} parent=1 // pred_check
      _
    $region47: #{tpu_custom_call.1} parent=1 // pred_check_branch
      %584 = sbr.rel (0) target = $region49
    $region48: #{tpu_custom_call.1} parent=1 // pred_region
      %s586 = ssub.s32 64, 64
      %587 = vsyncadd [#allocation4], %s586
      %s589 = sshll.u32 [#allocation10], 4
      %s590 = int_to_ptr.vmem [resolvable:$true] %s589
      %592 = dma.vmem_to_hbm [thread:$0]  %s590, 64, %s7, [#allocation4]
    $region49: #{tpu_custom_call.1} parent=1 // pred_fallthru
      _
    // Predicated region
    $region50: #{tpu_custom_call.1} parent=1 // pred_check
      _
    $region51: #{tpu_custom_call.1} parent=1 // pred_check_branch
      %594 = sbr.rel (0) target = $region53
    $region52: #{tpu_custom_call.1} parent=1 // pred_region
      %595 = dma.done [#allocation4], 64
    $region53: #{tpu_custom_call.1} parent=1 // pred_fallthru
      _
    %596 = vsyncpa [#allocation3], 1
    %597 = vsyncpa [#allocation6], 1
    %598 = vsyncpa [#allocation9], 1
    %599 = vsyncpa [#allocation4], 1

</llo_original>
